<compile_context>
chip_gen: v7x
topology: tpu7x:2x2x1
jax: 0.10.0
libtpu: 0.0.40
codegen_flags: <defaults>
</compile_context>

<pallas_src>
import functools

import jax
import jax.numpy as jnp
from jax.experimental import pallas as pl
from jax.experimental.pallas import tpu as pltpu

_EPS = 1e-5
_MM_DTYPE = jnp.bfloat16      # MXU operand / HBM intermediate dtype (f32 accumulation)


# ---------------------------------------------------------------------------
# Chip-adaptive sizing helpers.
# ---------------------------------------------------------------------------
def _vmem_budget_bytes():
    """Scoped-VMEM budget with headroom: ~48 MiB on v7x (64 MiB/TC), ~96 MiB on v5e/v6e."""
    try:
        cap = int(pltpu.get_tpu_info().vmem_capacity_bytes)
    except Exception:
        cap = 64 * 1024 * 1024
    return min((cap * 3) // 4, 96 * 1024 * 1024)


def _largest_divisor_at_most(n, cap):
    cap = max(1, min(n, cap))
    for d in range(cap, 0, -1):
        if n % d == 0:
            return d
    return 1


def _pick_row_tile(h_pooled, vmem_budget, requested=None):
    """Row-tile height (in pooled rows) per grid step; must divide the pooled height."""
    if requested is None:
        requested = 16 if vmem_budget <= 56 * 1024 * 1024 else 32
    return _largest_divisor_at_most(h_pooled, requested)


def _pick_flat_tile(m, cap=4096):
    """Row block for the flattened (N*H*W, C) BN+ReLU pass; divides m, sublane-aligned."""
    for d in range(min(m, cap), 0, -1):
        if m % d == 0 and (d % 8 == 0 or d == m):
            return d
    return m


def _compiler_params(grid_rank, vmem_budget):
    return pltpu.CompilerParams(
        dimension_semantics=("parallel",) * grid_rank,
        vmem_limit_bytes=int(vmem_budget),
    )


# ---------------------------------------------------------------------------
# In-kernel 3x3 conv on a row tile with a 1-row halo on each side.
# ---------------------------------------------------------------------------
def _conv3x3_acc(hcat_f32, w_ref, split_kh):
    """hcat_f32: (TH+2, W, C) f32 (activation rows + one halo row each side).
    w_ref: (3, 3*C, Co) bf16 if split_kh else (9*C, Co) bf16.
    Returns the f32 accumulator of shape (TH*W, Co)."""
    th2, w, c = hcat_f32.shape
    th = th2 - 2
    # Small (1, W, 1) boundary-column mask instead of a full-activation-sized iota.
    col = jax.lax.broadcasted_iota(jnp.int32, (1, w, 1), 1)
    # Only two rolls+masks per conv (left/right shifted copies of the whole halo'd tile);
    # the rolls stay f32 for lowering safety, the copies are cast to bf16 right away so
    # the per-kh concats and the im2col slab move bf16 only.
    left = pltpu.roll(hcat_f32, shift=1, axis=1)             # tap kw=0: in[.., j-1]
    left = jnp.where(col == 0, jnp.zeros_like(left), left).astype(_MM_DTYPE)
    mid = hcat_f32.astype(_MM_DTYPE)                         # tap kw=1
    right = pltpu.roll(hcat_f32, shift=w - 1, axis=1)        # tap kw=2: in[.., j+1]
    right = jnp.where(col == w - 1, jnp.zeros_like(right), right).astype(_MM_DTYPE)
    shifted = (left, mid, right)

    acc = None
    cols_all = []
    for kh in range(3):
        cols = jnp.concatenate([s[kh:kh + th] for s in shifted], axis=-1)  # (TH, W, 3C)
        if split_kh:
            part = jnp.dot(cols.reshape(th * w, 3 * c), w_ref[kh],
                           preferred_element_type=jnp.float32)
            acc = part if acc is None else acc + part
        else:
            cols_all.append(cols)
    if not split_kh:
        cols9 = jnp.concatenate(cols_all, axis=-1)                         # (TH, W, 9C)
        acc = jnp.dot(cols9.reshape(th * w, 9 * c), w_ref[...],
                      preferred_element_type=jnp.float32)
    return acc


def _store_stats(st_ref, acc):
    # One-pass per-tile partial sums (f32) for the global BatchNorm statistics.
    s = jnp.sum(acc, axis=0, keepdims=True)
    ss = jnp.sum(acc * acc, axis=0, keepdims=True)
    st_ref[...] = jnp.concatenate([s, ss], axis=0)


# ---------------------------------------------------------------------------
# Kernels.
# ---------------------------------------------------------------------------
def _pool_conv1_kernel(split_kh, x_ref, top_ref, bot_ref, w_ref, a1_ref, st_ref):
    # x_ref  : (2*TH, W, 2*Cin) f32  raw rows of this tile, W-pool pairs folded in lanes
    # top/bot: (2, W, 2*Cin)    f32  raw row pair just above/below (zeros at edges)
    # w_ref  : bf16 conv1 weights;  a1_ref: (TH, W, Cmid) bf16;  st_ref: (2, Cmid) f32
    th2, w, cin2 = x_ref.shape
    th, cin = th2 // 2, cin2 // 2
    cmid = a1_ref.shape[-1]

    def pool(v):  # (2R, W, 2*Cin) -> (R, W, Cin): MaxPool2d(2), f32 on the VPU
        v = v.reshape(v.shape[0] // 2, 2, w, cin2)
        vh = jnp.maximum(v[:, 0], v[:, 1])
        return jnp.maximum(vh[..., :cin], vh[..., cin:])

    # Zero halos at the sample edges pool to exactly 0 == the conv zero-padding row.
    hcat = jnp.concatenate(
        [pool(top_ref[...]), pool(x_ref[...]), pool(bot_ref[...])], axis=0)  # (TH+2,W,Cin)
    acc = _conv3x3_acc(hcat, w_ref, split_kh)                                # (TH*W,Cmid)
    a1_ref[...] = acc.reshape(th, w, cmid).astype(a1_ref.dtype)   # bf16 HBM intermediate
    _store_stats(st_ref, acc)


def _bn_relu_conv2_kernel(split_kh, a1_ref, top_ref, bot_ref, sc_ref, sh_ref, w_ref,
                          a2_ref, st_ref):
    # a1_ref : (TH, W, Cmid) bf16;  top/bot: (1, W, Cmid) bf16 halo rows
    # sc/sh  : (1, Cmid) f32 BN1 scale/shift;  w_ref: bf16 conv2 weights
    # a2_ref : (TH, W, Cout) bf16;  st_ref: (2, Cout) f32
    th, w, cmid = a1_ref.shape
    cout = a2_ref.shape[-1]
    sc = sc_ref[...]
    sh = sh_ref[...]

    def bn_relu(v):  # elementwise math stays f32 (v5e VPU has no bf16 path)
        return jnp.maximum(v.astype(jnp.float32) * sc + sh, 0.0)

    # conv2's zero padding lives in h = relu(bn(a1)) space, so the halo rows must be
    # forced to zero at the sample edges *after* BN+ReLU (multiplicative masks).
    t = pl.program_id(1)
    keep_top = (t > 0).astype(jnp.float32)
    keep_bot = (t < pl.num_programs(1) - 1).astype(jnp.float32)
    h_top = bn_relu(top_ref[...]) * keep_top
    h_bot = bn_relu(bot_ref[...]) * keep_bot
    hcat = jnp.concatenate([h_top, bn_relu(a1_ref[...]), h_bot], axis=0)  # (TH+2,W,Cmid)

    acc = _conv3x3_acc(hcat, w_ref, split_kh)                             # (TH*W, Cout)
    a2_ref[...] = acc.reshape(th, w, cout).astype(a2_ref.dtype)
    _store_stats(st_ref, acc)


def _bn_relu_kernel(a_ref, sc_ref, sh_ref, o_ref):
    # Lane-dense elementwise pass on a flattened (rows, C) view.
    o_ref[...] = jnp.maximum(a_ref[...].astype(jnp.float32) * sc_ref[...] + sh_ref[...],
                             0.0).astype(o_ref.dtype)


# ---------------------------------------------------------------------------
# Tiny XLA glue: combine per-tile partial sums into BN scale/shift.
# ---------------------------------------------------------------------------
def _bn_scale_shift(stats, count, gamma, beta):
    """stats: (N, T, 2, C) per-tile [sum, sum_sq] -> per-channel BN scale/shift (f32)."""
    s = jnp.sum(stats[:, :, 0, :], axis=(0, 1))
    ss = jnp.sum(stats[:, :, 1, :], axis=(0, 1))
    mean = s / count
    var = jnp.maximum(ss / count - mean * mean, 0.0)
    scale = gamma.reshape(-1) * jax.lax.rsqrt(var + _EPS)
    shift = beta.reshape(-1) - mean * scale
    return scale.reshape(1, -1), shift.reshape(1, -1)


# ---------------------------------------------------------------------------
# Forward wrappers.
# ---------------------------------------------------------------------------
def down_forward_nhwc(x_nhwc, params, *, row_tile=None):
    """Down(in_ch, out_ch).forward on NHWC input (native TPU layout, no transposes)."""
    w1, b1, g1, be1, w2, b2, g2, be2 = params
    del b1, b2   # conv bias cancels exactly inside training-mode BatchNorm
    n, in_h, in_w, cin = x_nhwc.shape
    h, w = in_h // 2, in_w // 2
    cmid, cout = w1.shape[-1], w2.shape[-1]
    f32 = jnp.float32

    # nn.MaxPool2d(2) floors odd spatial sizes.
    if (in_h % 2) or (in_w % 2):
        x_nhwc = x_nhwc[:, :2 * h, :2 * w, :]

    vmem_budget = _vmem_budget_bytes()
    th = _pick_row_tile(h, vmem_budget, row_tile)
    t_tiles = h // th

    # Fold W-pool pairs into lanes and split H into row tiles: free HBM reshape.
    xg = x_nhwc.reshape(n, t_tiles, 2 * th, w, 2 * cin)
    # Raw row-pair halos (pooled in-kernel); zeros at the sample edges.  Cheap strided
    # slices in XLA: ~2/TH extra HBM traffic instead of overlapping-block re-reads.
    top_raw = jnp.pad(xg[:, :-1, -2:], ((0, 0), (1, 0), (0, 0), (0, 0), (0, 0)))
    bot_raw = jnp.pad(xg[:, 1:, :2], ((0, 0), (0, 1), (0, 0), (0, 0), (0, 0)))

    # Per-kh (K = 3*C) matmul grouping once K is MXU-friendly; single K = 9*C otherwise.
    # NOTE: for layers with Cmid/Cout < 128 the output lane width is sub-128 (masked
    # stores); padding the weight N-dim to 128 is a possible further trade-off.
    split1 = (3 * cin) >= 128
    split2 = (3 * cmid) >= 128
    w1g = (w1.reshape(3, 3 * cin, cmid) if split1
           else w1.reshape(9 * cin, cmid)).astype(_MM_DTYPE)
    w2g = (w2.reshape(3, 3 * cmid, cout) if split2
           else w2.reshape(9 * cmid, cout)).astype(_MM_DTYPE)

    cp2 = _compiler_params(2, vmem_budget)
    npix = float(n * h * w)

    # --- K1: MaxPool2d(2) + conv1(3x3); grid over (sample, row tile), both parallel ---
    a1g, st1 = pl.pallas_call(
        functools.partial(_pool_conv1_kernel, split1),
        out_shape=(jax.ShapeDtypeStruct((n, t_tiles, th, w, cmid), _MM_DTYPE),
                   jax.ShapeDtypeStruct((n, t_tiles, 2, cmid), f32)),
        grid=(n, t_tiles),
        in_specs=[
            pl.BlockSpec((None, None, 2 * th, w, 2 * cin), lambda i, j: (i, j, 0, 0, 0)),
            pl.BlockSpec((None, None, 2, w, 2 * cin), lambda i, j: (i, j, 0, 0, 0)),
            pl.BlockSpec((None, None, 2, w, 2 * cin), lambda i, j: (i, j, 0, 0, 0)),
            pl.BlockSpec(w1g.shape, lambda i, j: (0,) * w1g.ndim),
        ],
        out_specs=(
            pl.BlockSpec((None, None, th, w, cmid), lambda i, j: (i, j, 0, 0, 0)),
            pl.BlockSpec((None, None, 2, cmid), lambda i, j: (i, j, 0, 0)),
        ),
        compiler_params=cp2,
    )(xg, top_raw, bot_raw, w1g)

    sc1, sh1 = _bn_scale_shift(st1, npix, g1, be1)     # tiny XLA glue (global BN stats)

    # bf16 halo rows for conv2 (pooled rows t*TH-1 / t*TH+TH); zeros at sample edges.
    top1 = jnp.pad(a1g[:, :-1, th - 1:th], ((0, 0), (1, 0), (0, 0), (0, 0), (0, 0)))
    bot1 = jnp.pad(a1g[:, 1:, 0:1], ((0, 0), (0, 1), (0, 0), (0, 0), (0, 0)))

    # --- K2: BN1 + ReLU + conv2(3x3) ---
    a2g, st2 = pl.pallas_call(
        functools.partial(_bn_relu_conv2_kernel, split2),
        out_shape=(jax.ShapeDtypeStruct((n, t_tiles, th, w, cout), _MM_DTYPE),
                   jax.ShapeDtypeStruct((n, t_tiles, 2, cout), f32)),
        grid=(n, t_tiles),
        in_specs=[
            pl.BlockSpec((None, None, th, w, cmid), lambda i, j: (i, j, 0, 0, 0)),
            pl.BlockSpec((None, None, 1, w, cmid), lambda i, j: (i, j, 0, 0, 0)),
            pl.BlockSpec((None, None, 1, w, cmid), lambda i, j: (i, j, 0, 0, 0)),
            pl.BlockSpec((1, cmid), lambda i, j: (0, 0)),
            pl.BlockSpec((1, cmid), lambda i, j: (0, 0)),
            pl.BlockSpec(w2g.shape, lambda i, j: (0,) * w2g.ndim),
        ],
        out_specs=(
            pl.BlockSpec((None, None, th, w, cout), lambda i, j: (i, j, 0, 0, 0)),
            pl.BlockSpec((None, None, 2, cout), lambda i, j: (i, j, 0, 0)),
        ),
        compiler_params=cp2,
    )(a1g, top1, bot1, sc1, sh1, w2g)

    sc2, sh2 = _bn_scale_shift(st2, npix, g2, be2)

    # --- K3: BN2 + ReLU on a flattened lane-dense (N*H*W, Cout) view ---
    m = n * h * w
    tr = _pick_flat_tile(m)
    y_flat = pl.pallas_call(
        _bn_relu_kernel,
        out_shape=jax.ShapeDtypeStruct((m, cout), x_nhwc.dtype),
        grid=(m // tr,),
        in_specs=[pl.BlockSpec((tr, cout), lambda i: (i, 0)),
                  pl.BlockSpec((1, cout), lambda i: (0, 0)),
                  pl.BlockSpec((1, cout), lambda i: (0, 0))],
        out_specs=pl.BlockSpec((tr, cout), lambda i: (i, 0)),
        compiler_params=_compiler_params(1, vmem_budget),
    )(a2g.reshape(m, cout), sc2, sh2)
    return y_flat.reshape(n, h, w, cout)


def down_forward(x_nchw, params, *, row_tile=None):
    """PyTorch-interface wrapper: NCHW in / NCHW out (transposes are interface glue only;
    in a full UNet keep activations NHWC end-to-end and call down_forward_nhwc)."""
    x = jnp.transpose(x_nchw, (0, 2, 3, 1))
    y = down_forward_nhwc(x, params, row_tile=row_tile)
    return jnp.transpose(y, (0, 3, 1, 2))


def down_ref(x_nchw, params, conv_dtype=jnp.float32, quantize_inter=False):
    """Plain-JAX reference of Down.forward (NCHW in/out).  conv_dtype selects the conv
    operand precision; quantize_inter mimics the kernel's bf16 HBM intermediates."""
    w1, b1, g1, be1, w2, b2, g2, be2 = params
    x = jnp.transpose(x_nchw, (0, 2, 3, 1))
    n, h, w, c = x.shape
    x = x[:, :2 * (h // 2), :2 * (w // 2), :]
    pooled = jnp.max(x.reshape(n, h // 2, 2, w // 2, 2, c), axis=(2, 4))

    def conv_bn_relu(hin, wgt, b, g, be):
        y = jax.lax.conv_general_dilated(
            hin.astype(conv_dtype), wgt.astype(conv_dtype), window_strides=(1, 1),
            padding="SAME", dimension_numbers=("NHWC", "HWIO", "NHWC"),
            preferred_element_type=jnp.float32)
        y = y + b.reshape(1, 1, 1, -1)
        mean = jnp.mean(y, axis=(0, 1, 2), keepdims=True)
        var = jnp.mean((y - mean) ** 2, axis=(0, 1, 2), keepdims=True)
        if quantize_inter:
            y = y.astype(jnp.bfloat16).astype(jnp.float32)
        y = (y - mean) * jax.lax.rsqrt(var + _EPS) * g.reshape(1, 1, 1, -1) \
            + be.reshape(1, 1, 1, -1)
        return jnp.maximum(y, 0.0)

    hmid = conv_bn_relu(pooled, w1, b1, g1, be1)
    hout = conv_bn_relu(hmid, w2, b2, g2, be2)
    return jnp.transpose(hout, (0, 3, 1, 2))


if __name__ == "__main__":
    N, CIN, H, W = 2, 4, 16, 16
    COUT = 8  # Down(4, 8): conv1 4->8, conv2 8->8

    key = jax.random.PRNGKey(0)
    kx, kw1, kb1, kg1, kbe1, kw2, kb2, kg2, kbe2 = jax.random.split(key, 9)

    x = jax.random.normal(kx, (N, CIN, H, W), jnp.float32)

    # Synthetic parameters (HWIO weight layout; per-channel BN params).
    w1 = 0.1 * jax.random.normal(kw1, (3, 3, CIN, COUT), jnp.float32)
    b1 = 0.1 * jax.random.normal(kb1, (1, COUT), jnp.float32)
    g1 = 1.0 + 0.1 * jax.random.normal(kg1, (1, COUT), jnp.float32)
    be1 = 0.1 * jax.random.normal(kbe1, (1, COUT), jnp.float32)
    w2 = 0.1 * jax.random.normal(kw2, (3, 3, COUT, COUT), jnp.float32)
    b2 = 0.1 * jax.random.normal(kb2, (1, COUT), jnp.float32)
    g2 = 1.0 + 0.1 * jax.random.normal(kg2, (1, COUT), jnp.float32)
    be2 = 0.1 * jax.random.normal(kbe2, (1, COUT), jnp.float32)
    params = (w1, b1, g1, be1, w2, b2, g2, be2)

    # row_tile=4 -> 2 row tiles over the 8 pooled rows: exercises the halo machinery.
    out = jax.block_until_ready(down_forward(x, params, row_tile=4))
    assert out.shape == (N, COUT, H // 2, W // 2), out.shape

    # Matched-precision reference (bf16 MXU operands + bf16 HBM intermediates, f32 acc).
    ref_mm = down_ref(x, params, conv_dtype=_MM_DTYPE, quantize_inter=True)
    err = float(jnp.max(jnp.abs(out - ref_mm)))
    assert err < 5e-2, f"mismatch vs matched-precision reference: max abs err = {err}"

    # Loose sanity check vs the exact-f32 reference (bf16 operands/intermediates differ).
    ref_f32 = down_ref(x, params, conv_dtype=jnp.float32)
    err32 = float(jnp.max(jnp.abs(out - ref_f32)))
    assert err32 < 2e-1, f"kernel drifted from f32 reference: max abs err = {err32}"

    # Auto row-tile (single tile at this size) must agree with the 2-tile run.
    out_auto = jax.block_until_ready(down_forward(x, params))
    err_tile = float(jnp.max(jnp.abs(out - out_auto)))
    assert err_tile < 1e-3, f"row-tiled vs single-tile mismatch: {err_tile}"

    print("KERNEL_OK")
</pallas_src>

<mosaic_0001>
module attributes {stable_mosaic.version = 11 : i64} {
  func.func @_pool_conv1_kernel(%arg0: i32, %arg1: i32, %arg2: memref<1x1x8x8x8xf32, #tpu.memory_space<vmem>>, %arg3: memref<1x1x2x8x8xf32, #tpu.memory_space<vmem>>, %arg4: memref<1x1x2x8x8xf32, #tpu.memory_space<vmem>>, %arg5: memref<36x8xbf16, #tpu.memory_space<vmem>>, %arg6: memref<1x1x4x8x8xbf16, #tpu.memory_space<vmem>>, %arg7: memref<1x1x2x8xf32, #tpu.memory_space<vmem>>) attributes {dimension_semantics = [#tpu.dimension_semantics<parallel>, #tpu.dimension_semantics<parallel>], iteration_bounds = array<i64: 2, 2>, scalar_prefetch = 0 : i64, scratch_operands = 0 : i64, tpu.core_type = #tpu.core_type<tc>, window_params = [{transform_indices = @transform_0, window_bounds = array<i64: 1, 1, 8, 8, 8>}, {transform_indices = @transform_1, window_bounds = array<i64: 1, 1, 2, 8, 8>}, {transform_indices = @transform_2, window_bounds = array<i64: 1, 1, 2, 8, 8>}, {pipeline_mode = #tpu.pipeline_mode<synchronous>, transform_indices = @transform_3, window_bounds = array<i64: 36, 8>}, {transform_indices = @transform_4, window_bounds = array<i64: 1, 1, 4, 8, 8>}, {transform_indices = @transform_5, window_bounds = array<i64: 1, 1, 2, 8>}]} {
    %c0 = arith.constant 0 : index
    %c0_0 = arith.constant 0 : index
    %c0_1 = arith.constant 0 : index
    %c0_2 = arith.constant 0 : index
    %c0_3 = arith.constant 0 : index
    %0 = vector.load %arg3[%c0, %c0_0, %c0_1, %c0_2, %c0_3] : memref<1x1x2x8x8xf32, #tpu.memory_space<vmem>>, vector<1x1x2x8x8xf32>
    %1 = vector.shape_cast %0 : vector<1x1x2x8x8xf32> to vector<2x8x8xf32>
    %2 = vector.shape_cast %1 : vector<2x8x8xf32> to vector<1x2x8x8xf32>
    %3 = vector.extract_strided_slice %2 {offsets = [0, 0, 0, 0], sizes = [1, 1, 8, 8], strides = [1, 1, 1, 1]} : vector<1x2x8x8xf32> to vector<1x1x8x8xf32>
    %4 = vector.shape_cast %3 : vector<1x1x8x8xf32> to vector<1x8x8xf32>
    %5 = vector.extract_strided_slice %2 {offsets = [0, 1, 0, 0], sizes = [1, 1, 8, 8], strides = [1, 1, 1, 1]} : vector<1x2x8x8xf32> to vector<1x1x8x8xf32>
    %6 = vector.shape_cast %5 : vector<1x1x8x8xf32> to vector<1x8x8xf32>
    %7 = arith.maximumf %4, %6 : vector<1x8x8xf32>
    %8 = vector.extract_strided_slice %7 {offsets = [0, 0, 0], sizes = [1, 8, 4], strides = [1, 1, 1]} : vector<1x8x8xf32> to vector<1x8x4xf32>
    %9 = vector.extract_strided_slice %7 {offsets = [0, 0, 4], sizes = [1, 8, 4], strides = [1, 1, 1]} : vector<1x8x8xf32> to vector<1x8x4xf32>
    %10 = arith.maximumf %8, %9 : vector<1x8x4xf32>
    %c0_4 = arith.constant 0 : index
    %c0_5 = arith.constant 0 : index
    %c0_6 = arith.constant 0 : index
    %c0_7 = arith.constant 0 : index
    %c0_8 = arith.constant 0 : index
    %11 = vector.load %arg2[%c0_4, %c0_5, %c0_6, %c0_7, %c0_8] : memref<1x1x8x8x8xf32, #tpu.memory_space<vmem>>, vector<1x1x8x8x8xf32>
    %12 = vector.shape_cast %11 : vector<1x1x8x8x8xf32> to vector<8x8x8xf32>
    %13 = vector.shape_cast %12 : vector<8x8x8xf32> to vector<4x2x8x8xf32>
    %14 = vector.extract_strided_slice %13 {offsets = [0, 0, 0, 0], sizes = [4, 1, 8, 8], strides = [1, 1, 1, 1]} : vector<4x2x8x8xf32> to vector<4x1x8x8xf32>
    %15 = vector.shape_cast %14 : vector<4x1x8x8xf32> to vector<4x8x8xf32>
    %16 = vector.extract_strided_slice %13 {offsets = [0, 1, 0, 0], sizes = [4, 1, 8, 8], strides = [1, 1, 1, 1]} : vector<4x2x8x8xf32> to vector<4x1x8x8xf32>
    %17 = vector.shape_cast %16 : vector<4x1x8x8xf32> to vector<4x8x8xf32>
    %18 = arith.maximumf %15, %17 : vector<4x8x8xf32>
    %19 = vector.extract_strided_slice %18 {offsets = [0, 0, 0], sizes = [4, 8, 4], strides = [1, 1, 1]} : vector<4x8x8xf32> to vector<4x8x4xf32>
    %20 = vector.extract_strided_slice %18 {offsets = [0, 0, 4], sizes = [4, 8, 4], strides = [1, 1, 1]} : vector<4x8x8xf32> to vector<4x8x4xf32>
    %21 = arith.maximumf %19, %20 : vector<4x8x4xf32>
    %c0_9 = arith.constant 0 : index
    %c0_10 = arith.constant 0 : index
    %c0_11 = arith.constant 0 : index
    %c0_12 = arith.constant 0 : index
    %c0_13 = arith.constant 0 : index
    %22 = vector.load %arg4[%c0_9, %c0_10, %c0_11, %c0_12, %c0_13] : memref<1x1x2x8x8xf32, #tpu.memory_space<vmem>>, vector<1x1x2x8x8xf32>
    %23 = vector.shape_cast %22 : vector<1x1x2x8x8xf32> to vector<2x8x8xf32>
    %24 = vector.shape_cast %23 : vector<2x8x8xf32> to vector<1x2x8x8xf32>
    %25 = vector.extract_strided_slice %24 {offsets = [0, 0, 0, 0], sizes = [1, 1, 8, 8], strides = [1, 1, 1, 1]} : vector<1x2x8x8xf32> to vector<1x1x8x8xf32>
    %26 = vector.shape_cast %25 : vector<1x1x8x8xf32> to vector<1x8x8xf32>
    %27 = vector.extract_strided_slice %24 {offsets = [0, 1, 0, 0], sizes = [1, 1, 8, 8], strides = [1, 1, 1, 1]} : vector<1x2x8x8xf32> to vector<1x1x8x8xf32>
    %28 = vector.shape_cast %27 : vector<1x1x8x8xf32> to vector<1x8x8xf32>
    %29 = arith.maximumf %26, %28 : vector<1x8x8xf32>
    %30 = vector.extract_strided_slice %29 {offsets = [0, 0, 0], sizes = [1, 8, 4], strides = [1, 1, 1]} : vector<1x8x8xf32> to vector<1x8x4xf32>
    %31 = vector.extract_strided_slice %29 {offsets = [0, 0, 4], sizes = [1, 8, 4], strides = [1, 1, 1]} : vector<1x8x8xf32> to vector<1x8x4xf32>
    %32 = arith.maximumf %30, %31 : vector<1x8x4xf32>
    %33 = tpu.concatenate %10, %21, %32 in 0 : vector<1x8x4xf32>, vector<4x8x4xf32>, vector<1x8x4xf32> -> vector<6x8x4xf32>
    %34 = tpu.iota {dimensions = array<i32: 1>} : vector<1x8x1xi32>
    %c1_i32 = arith.constant 1 : i32
    %35 = tpu.dynamic_rotate %33 by %c1_i32 dim 1 : vector<6x8x4xf32>, i32 -> vector<6x8x4xf32>
    %c0_i32 = arith.constant 0 : i32
    %36 = vector.broadcast %c0_i32 : i32 to vector<1x8x1xi32>
    %37 = arith.cmpi eq, %34, %36 : vector<1x8x1xi32>
    %cst = arith.constant 0.000000e+00 : f32
    %38 = vector.broadcast %cst : f32 to vector<6x8x4xf32>
    %39 = vector.shape_cast %37 : vector<1x8x1xi1> to vector<1x8x1xi1>
    %40 = vector.broadcast %39 : vector<1x8x1xi1> to vector<6x8x4xi1>
    %41 = arith.select %40, %38, %35 : vector<6x8x4xi1>, vector<6x8x4xf32>
    %42 = arith.truncf %41 : vector<6x8x4xf32> to vector<6x8x4xbf16>
    %43 = arith.truncf %33 : vector<6x8x4xf32> to vector<6x8x4xbf16>
    %c7_i32 = arith.constant 7 : i32
    %44 = tpu.dynamic_rotate %33 by %c7_i32 dim 1 : vector<6x8x4xf32>, i32 -> vector<6x8x4xf32>
    %c7_i32_14 = arith.constant 7 : i32
    %45 = vector.broadcast %c7_i32_14 : i32 to vector<1x8x1xi32>
    %46 = arith.cmpi eq, %34, %45 : vector<1x8x1xi32>
    %cst_15 = arith.constant 0.000000e+00 : f32
    %47 = vector.broadcast %cst_15 : f32 to vector<6x8x4xf32>
    %48 = vector.shape_cast %46 : vector<1x8x1xi1> to vector<1x8x1xi1>
    %49 = vector.broadcast %48 : vector<1x8x1xi1> to vector<6x8x4xi1>
    %50 = arith.select %49, %47, %44 : vector<6x8x4xi1>, vector<6x8x4xf32>
    %51 = arith.truncf %50 : vector<6x8x4xf32> to vector<6x8x4xbf16>
    %52 = vector.extract_strided_slice %42 {offsets = [0, 0, 0], sizes = [4, 8, 4], strides = [1, 1, 1]} : vector<6x8x4xbf16> to vector<4x8x4xbf16>
    %53 = vector.extract_strided_slice %43 {offsets = [0, 0, 0], sizes = [4, 8, 4], strides = [1, 1, 1]} : vector<6x8x4xbf16> to vector<4x8x4xbf16>
    %54 = vector.extract_strided_slice %51 {offsets = [0, 0, 0], sizes = [4, 8, 4], strides = [1, 1, 1]} : vector<6x8x4xbf16> to vector<4x8x4xbf16>
    %55 = tpu.concatenate %52, %53, %54 in 2 : vector<4x8x4xbf16>, vector<4x8x4xbf16>, vector<4x8x4xbf16> -> vector<4x8x12xbf16>
    %56 = vector.extract_strided_slice %42 {offsets = [1, 0, 0], sizes = [4, 8, 4], strides = [1, 1, 1]} : vector<6x8x4xbf16> to vector<4x8x4xbf16>
    %57 = vector.extract_strided_slice %43 {offsets = [1, 0, 0], sizes = [4, 8, 4], strides = [1, 1, 1]} : vector<6x8x4xbf16> to vector<4x8x4xbf16>
    %58 = vector.extract_strided_slice %51 {offsets = [1, 0, 0], sizes = [4, 8, 4], strides = [1, 1, 1]} : vector<6x8x4xbf16> to vector<4x8x4xbf16>
    %59 = tpu.concatenate %56, %57, %58 in 2 : vector<4x8x4xbf16>, vector<4x8x4xbf16>, vector<4x8x4xbf16> -> vector<4x8x12xbf16>
    %60 = vector.extract_strided_slice %42 {offsets = [2, 0, 0], sizes = [4, 8, 4], strides = [1, 1, 1]} : vector<6x8x4xbf16> to vector<4x8x4xbf16>
    %61 = vector.extract_strided_slice %43 {offsets = [2, 0, 0], sizes = [4, 8, 4], strides = [1, 1, 1]} : vector<6x8x4xbf16> to vector<4x8x4xbf16>
    %62 = vector.extract_strided_slice %51 {offsets = [2, 0, 0], sizes = [4, 8, 4], strides = [1, 1, 1]} : vector<6x8x4xbf16> to vector<4x8x4xbf16>
    %63 = tpu.concatenate %60, %61, %62 in 2 : vector<4x8x4xbf16>, vector<4x8x4xbf16>, vector<4x8x4xbf16> -> vector<4x8x12xbf16>
    %64 = tpu.concatenate %55, %59, %63 in 2 : vector<4x8x12xbf16>, vector<4x8x12xbf16>, vector<4x8x12xbf16> -> vector<4x8x36xbf16>
    %65 = vector.shape_cast %64 : vector<4x8x36xbf16> to vector<32x36xbf16>
    %c0_16 = arith.constant 0 : index
    %c0_17 = arith.constant 0 : index
    %66 = vector.load %arg5[%c0_16, %c0_17] : memref<36x8xbf16, #tpu.memory_space<vmem>>, vector<36x8xbf16>
    %cst_18 = arith.constant dense<0.000000e+00> : vector<32x8xf32>
    %67 = tpu.matmul %65, %66, %cst_18 {dimension_numbers = #tpu.dot_dimension_numbers<[1], [0], [0], [1], [0, 0, 1, 1], [], []>} : vector<32x36xbf16>, vector<36x8xbf16>, vector<32x8xf32> -> vector<32x8xf32>
    %68 = vector.shape_cast %67 : vector<32x8xf32> to vector<4x8x8xf32>
    %69 = arith.truncf %68 : vector<4x8x8xf32> to vector<4x8x8xbf16>
    %c0_19 = arith.constant 0 : index
    %c0_20 = arith.constant 0 : index
    %c0_21 = arith.constant 0 : index
    %c0_22 = arith.constant 0 : index
    %c0_23 = arith.constant 0 : index
    %70 = vector.load %arg6[%c0_19, %c0_20, %c0_21, %c0_22, %c0_23] : memref<1x1x4x8x8xbf16, #tpu.memory_space<vmem>>, vector<1x1x4x8x8xbf16>
    %71 = vector.shape_cast %70 : vector<1x1x4x8x8xbf16> to vector<4x8x8xbf16>
    %72 = vector.shape_cast %69 : vector<4x8x8xbf16> to vector<1x1x4x8x8xbf16>
    tpu.vector_store %arg6[%c0_19, %c0_20, %c0_21, %c0_22, %c0_23], %72 {strides = array<i32>} : memref<1x1x4x8x8xbf16, #tpu.memory_space<vmem>>, vector<1x1x4x8x8xbf16>,
    %cst_24 = arith.constant dense<0.000000e+00> : vector<8xf32>
    %73 = vector.multi_reduction <add>, %67, %cst_24 [0] : vector<32x8xf32> to vector<8xf32>
    %74 = vector.shape_cast %73 : vector<8xf32> to vector<1x8xf32>
    %75 = arith.mulf %67, %67 : vector<32x8xf32>
    %cst_25 = arith.constant dense<0.000000e+00> : vector<8xf32>
    %76 = vector.multi_reduction <add>, %75, %cst_25 [0] : vector<32x8xf32> to vector<8xf32>
    %77 = vector.shape_cast %76 : vector<8xf32> to vector<1x8xf32>
    %78 = tpu.concatenate %74, %77 in 0 : vector<1x8xf32>, vector<1x8xf32> -> vector<2x8xf32>
    %c0_26 = arith.constant 0 : index
    %c0_27 = arith.constant 0 : index
    %c0_28 = arith.constant 0 : index
    %c0_29 = arith.constant 0 : index
    %79 = vector.load %arg7[%c0_26, %c0_27, %c0_28, %c0_29] : memref<1x1x2x8xf32, #tpu.memory_space<vmem>>, vector<1x1x2x8xf32>
    %80 = vector.shape_cast %79 : vector<1x1x2x8xf32> to vector<2x8xf32>
    %81 = vector.shape_cast %78 : vector<2x8xf32> to vector<1x1x2x8xf32>
    tpu.vector_store %arg7[%c0_26, %c0_27, %c0_28, %c0_29], %81 {strides = array<i32>} : memref<1x1x2x8xf32, #tpu.memory_space<vmem>>, vector<1x1x2x8xf32>,
    return
  }
  func.func @transform_0(%arg0: i32, %arg1: i32) -> (i32, i32, i32, i32, i32) {
    %c0_i32 = arith.constant 0 : i32
    %c0_i32_0 = arith.constant 0 : i32
    %c0_i32_1 = arith.constant 0 : i32
    %c0_i32_2 = arith.constant 0 : i32
    return %arg0, %arg1, %c0_i32, %c0_i32_0, %c0_i32_1 : i32, i32, i32, i32, i32
  }
  func.func @transform_1(%arg0: i32, %arg1: i32) -> (i32, i32, i32, i32, i32) {
    %c0_i32 = arith.constant 0 : i32
    %c0_i32_0 = arith.constant 0 : i32
    %c0_i32_1 = arith.constant 0 : i32
    %c0_i32_2 = arith.constant 0 : i32
    return %arg0, %arg1, %c0_i32, %c0_i32_0, %c0_i32_1 : i32, i32, i32, i32, i32
  }
  func.func @transform_2(%arg0: i32, %arg1: i32) -> (i32, i32, i32, i32, i32) {
    %c0_i32 = arith.constant 0 : i32
    %c0_i32_0 = arith.constant 0 : i32
    %c0_i32_1 = arith.constant 0 : i32
    %c0_i32_2 = arith.constant 0 : i32
    return %arg0, %arg1, %c0_i32, %c0_i32_0, %c0_i32_1 : i32, i32, i32, i32, i32
  }
  func.func @transform_3(%arg0: i32, %arg1: i32) -> (i32, i32) {
    %c0_i32 = arith.constant 0 : i32
    %c0_i32_0 = arith.constant 0 : i32
    %c0_i32_1 = arith.constant 0 : i32
    return %c0_i32, %c0_i32_0 : i32, i32
  }
  func.func @transform_4(%arg0: i32, %arg1: i32) -> (i32, i32, i32, i32, i32) {
    %c0_i32 = arith.constant 0 : i32
    %c0_i32_0 = arith.constant 0 : i32
    %c0_i32_1 = arith.constant 0 : i32
    %c0_i32_2 = arith.constant 0 : i32
    return %arg0, %arg1, %c0_i32, %c0_i32_0, %c0_i32_1 : i32, i32, i32, i32, i32
  }
  func.func @transform_5(%arg0: i32, %arg1: i32) -> (i32, i32, i32, i32) {
    %c0_i32 = arith.constant 0 : i32
    %c0_i32_0 = arith.constant 0 : i32
    %c0_i32_1 = arith.constant 0 : i32
    return %arg0, %arg1, %c0_i32, %c0_i32_0 : i32, i32, i32, i32
  }
}

</mosaic_0001>

<llo_original>
// kernel: tpu_custom_call.1
$region0: #{tpu_custom_call.1}
  #allocation0 [shape = 'u32[]', space=smem, size = 0x4, offset = 0x4, fixed_abs, tag = 'smem constant byte address 0x4 - core index']
  #allocation1 [shape = 'u32[144,128]{1,0:T(1,128)}', space=vmem, size = 0x12000, scoped, tag = 'internal scratch']
  %s0 = inlined_call_operand.hbm [shape: f32[2,2,8,8,8], index: 0, kind: input, shape index: {}]
  %s1 = inlined_call_operand.hbm [shape: f32[2,2,2,8,8], index: 1, kind: input, shape index: {}]
  %s2 = inlined_call_operand.hbm [shape: f32[2,2,2,8,8], index: 2, kind: input, shape index: {}]
  %s3 = inlined_call_operand.vmem [shape: bf16[36,8], index: 3, kind: input, shape index: {}]
  %s4 = inlined_call_operand.hbm [shape: bf16[2,2,4,8,8], index: 4, kind: output, shape index: {0}]
  %s5 = inlined_call_operand.hbm [shape: f32[2,2,2,8], index: 5, kind: output, shape index: {1}]
  %6 = xla_tuple %s4, %s5
  %s7 = sld [smem:[#allocation0]]
  $region69: #{tpu_custom_call.1} parent=0
    _
  %s9 = ssub.s32 1, %s7
  %s10 = scalar_select 0, %s9, %s7
  $region1: #{tpu_custom_call.1} parent=0
    #allocation2 [shape = 'u8[65536]{0}', space=vmem, size = 0x10000, scoped, tag = 'input window, operand 0']
    #allocation3 [shape = 's32[2]{0}', space=sflag, size = 0x8, scoped, tag = 'scoped memory for tpu_custom_call.1']
    #allocation4 [shape = 's32[2]{0}', space=sflag, size = 0x8, scoped, tag = 'scoped memory for tpu_custom_call.1']
    #allocation5 [shape = 'u8[16384]{0}', space=vmem, size = 0x4000, scoped, tag = 'input window, operand 1']
    #allocation6 [shape = 's32[2]{0}', space=sflag, size = 0x8, scoped, tag = 'scoped memory for tpu_custom_call.1']
    #allocation7 [shape = 'u8[16384]{0}', space=vmem, size = 0x4000, scoped, tag = 'input window, operand 2']
    #allocation8 [shape = 'u8[16384]{0}', space=vmem, size = 0x4000, scoped, tag = 'output window, operand 0']
    #allocation9 [shape = 'u8[2048]{0}', space=vmem, size = 0x800, scoped, tag = 'output window, operand 1']
    #allocation10 [shape = 's32[2]{0}', space=sflag, size = 0x8, scoped, tag = 'scoped memory for tpu_custom_call.1']
    %11 = vsyncpa [#allocation3], 0
    %s12 = scalar_lea.sflag [#allocation3], 1
    %13 = vsyncpa %s12, 0
    %14 = vsyncpa [#allocation6], 0
    %s15 = scalar_lea.sflag [#allocation6], 1
    %16 = vsyncpa %s15, 0
    %17 = vsyncpa [#allocation4], 0
    %s18 = scalar_lea.sflag [#allocation4], 1
    %19 = vsyncpa %s18, 0
    %20 = vsyncpa [#allocation10], 0
    %s21 = scalar_lea.sflag [#allocation10], 1
    %22 = vsyncpa %s21, 0
    loop: start=0, step=1, limit=6
    $region2: #{tpu_custom_call.1} parent=1 // loop_pre_header
      _
    $region3: #{tpu_custom_call.1} parent=1 // loop_header
      %s24 = sphi 0, %s28
      %p25 = scmp.ge.s32.totalorder %s24, 6
      %s31 = sphi 0, %s43
      %s32 = sphi 0, %s39
      %s33 = sphi 0, %s31
      %s34 = sphi 0, %s32
      %s35 = sphi 0, %s33
      %s36 = sphi 0, %s34
      %s48 = sphi 0, %s50
      %s51 = sphi 0, %s48
      %s52 = sphi 0, %s51
      %s68 = sphi 0, %s52
      %s76 = sphi 0, %s78
      %s79 = sphi 0, %s76
      %s80 = sphi 0, %s79
      %s96 = sphi 0, %s80
      %s104 = sphi 0, %s106
      %s107 = sphi 0, %s104
      %s108 = sphi 0, %s107
      %s124 = sphi 0, %s108
      %s128 = sphi 0, %s128
      %s130 = sphi 0, %s128
      %s131 = sphi 0, %s130
      %s145 = sphi 0, %s131
      %s153 = sphi 0, %s155
      %s156 = sphi 0, %s153
      %s157 = sphi 0, %s156
      %s173 = sphi 0, %s157
      %s181 = sphi 0, %s183
      %s184 = sphi 0, %s181
      %s185 = sphi 0, %s184
      %s201 = sphi 0, %s185
    $region4: #{tpu_custom_call.1} parent=1 // loop_header_branch
      %27 = sbr.rel (%p25) target = $region8
    $region5: #{tpu_custom_call.1} parent=1 // loop_body
      %s29 = ssub.s32 %s24, 1
      %s30 = ssub.s32 %s24, 2
      %s37 = sadd.s32 1, %s32
      %p38 = scmp.ge.s32.totalorder %s37, 2
      %s39 = scalar_select %p38, 0, %s37
      %s40 = sadd.s32 1, %s31
      %s41 = scalar_select %p38, %s40, %s31
      %p42 = scmp.ge.s32.totalorder %s41, 2
      %s43 = scalar_select %p42, 0, %s41
      %s44 = ssub.s32 %s31, %s43
      %s45 = ssub.s32 %s32, %s39
      %s46 = sor.u32 %s44, %s45
      %p47 = scmp.eq.s32.totalorder %s46, 0
      %s49 = sadd.s32 %s48, 1
      %s50 = scalar_select %p47, %s48, %s49
      %p53 = pneg %p47
      %p54 = scmp.eq.s32.totalorder %s24, 3
      %p55 = por %p53, %p54
      %p56 = scmp.ne.s32.totalorder %s48, %s51
      %p57 = scmp.eq.s32.totalorder %s24, 0
      %p58 = por %p56, %p57
      %p59 = scmp.ne.s32.totalorder %s48, %s51
      %p60 = scmp.eq.s32.totalorder %s29, 3
      %p61 = por %p59, %p60
      %p62 = scmp.ne.s32.totalorder %s51, %s52
      %p63 = scmp.eq.s32.totalorder %s29, 0
      %p64 = por %p62, %p63
      %p65 = scmp.ne.s32.totalorder %s51, %s52
      %p66 = scmp.eq.s32.totalorder %s30, 3
      %p67 = por %p65, %p66
      %p69 = scmp.ne.s32.totalorder %s52, %s68
      %p70 = scmp.eq.s32.totalorder %s30, 0
      %p71 = por %p69, %p70
      %s72 = ssub.s32 %s31, %s43
      %s73 = ssub.s32 %s32, %s39
      %s74 = sor.u32 %s72, %s73
      %p75 = scmp.eq.s32.totalorder %s74, 0
      %s77 = sadd.s32 %s76, 1
      %s78 = scalar_select %p75, %s76, %s77
      %p81 = pneg %p75
      %p82 = scmp.eq.s32.totalorder %s24, 3
      %p83 = por %p81, %p82
      %p84 = scmp.ne.s32.totalorder %s76, %s79
      %p85 = scmp.eq.s32.totalorder %s24, 0
      %p86 = por %p84, %p85
      %p87 = scmp.ne.s32.totalorder %s76, %s79
      %p88 = scmp.eq.s32.totalorder %s29, 3
      %p89 = por %p87, %p88
      %p90 = scmp.ne.s32.totalorder %s79, %s80
      %p91 = scmp.eq.s32.totalorder %s29, 0
      %p92 = por %p90, %p91
      %p93 = scmp.ne.s32.totalorder %s79, %s80
      %p94 = scmp.eq.s32.totalorder %s30, 3
      %p95 = por %p93, %p94
      %p97 = scmp.ne.s32.totalorder %s80, %s96
      %p98 = scmp.eq.s32.totalorder %s30, 0
      %p99 = por %p97, %p98
      %s100 = ssub.s32 %s31, %s43
      %s101 = ssub.s32 %s32, %s39
      %s102 = sor.u32 %s100, %s101
      %p103 = scmp.eq.s32.totalorder %s102, 0
      %s105 = sadd.s32 %s104, 1
      %s106 = scalar_select %p103, %s104, %s105
      %p109 = pneg %p103
      %p110 = scmp.eq.s32.totalorder %s24, 3
      %p111 = por %p109, %p110
      %p112 = scmp.ne.s32.totalorder %s104, %s107
      %p113 = scmp.eq.s32.totalorder %s24, 0
      %p114 = por %p112, %p113
      %p115 = scmp.ne.s32.totalorder %s104, %s107
      %p116 = scmp.eq.s32.totalorder %s29, 3
      %p117 = por %p115, %p116
      %p118 = scmp.ne.s32.totalorder %s107, %s108
      %p119 = scmp.eq.s32.totalorder %s29, 0
      %p120 = por %p118, %p119
      %p121 = scmp.ne.s32.totalorder %s107, %s108
      %p122 = scmp.eq.s32.totalorder %s30, 3
      %p123 = por %p121, %p122
      %p125 = scmp.ne.s32.totalorder %s108, %s124
      %p126 = scmp.eq.s32.totalorder %s30, 0
      %p127 = por %p125, %p126
      %s129 = sadd.s32 %s128, 1
      %p132 = scmp.eq.s32.totalorder %s24, 3
      %p133 = scmp.ne.s32.totalorder %s128, %s130
      %p134 = scmp.eq.s32.totalorder %s24, 0
      %p135 = por %p133, %p134
      %p136 = scmp.ne.s32.totalorder %s128, %s130
      %p137 = scmp.eq.s32.totalorder %s29, 3
      %p138 = por %p136, %p137
      %p139 = scmp.ne.s32.totalorder %s130, %s131
      %p140 = scmp.eq.s32.totalorder %s29, 0
      %p141 = por %p139, %p140
      %p142 = scmp.ne.s32.totalorder %s130, %s131
      %p143 = scmp.eq.s32.totalorder %s30, 3
      %p144 = por %p142, %p143
      %p146 = scmp.ne.s32.totalorder %s131, %s145
      %p147 = scmp.eq.s32.totalorder %s30, 0
      %p148 = por %p146, %p147
      %s149 = ssub.s32 %s31, %s43
      %s150 = ssub.s32 %s32, %s39
      %s151 = sor.u32 %s149, %s150
      %p152 = scmp.eq.s32.totalorder %s151, 0
      %s154 = sadd.s32 %s153, 1
      %s155 = scalar_select %p152, %s153, %s154
      %p158 = pneg %p152
      %p159 = scmp.eq.s32.totalorder %s24, 3
      %p160 = por %p158, %p159
      %p161 = scmp.ne.s32.totalorder %s153, %s156
      %p162 = scmp.eq.s32.totalorder %s24, 0
      %p163 = por %p161, %p162
      %p164 = scmp.ne.s32.totalorder %s153, %s156
      %p165 = scmp.eq.s32.totalorder %s29, 3
      %p166 = por %p164, %p165
      %p167 = scmp.ne.s32.totalorder %s156, %s157
      %p168 = scmp.eq.s32.totalorder %s29, 0
      %p169 = por %p167, %p168
      %p170 = scmp.ne.s32.totalorder %s156, %s157
      %p171 = scmp.eq.s32.totalorder %s30, 3
      %p172 = por %p170, %p171
      %p174 = scmp.ne.s32.totalorder %s157, %s173
      %p175 = scmp.eq.s32.totalorder %s30, 0
      %p176 = por %p174, %p175
      %s177 = ssub.s32 %s31, %s43
      %s178 = ssub.s32 %s32, %s39
      %s179 = sor.u32 %s177, %s178
      %p180 = scmp.eq.s32.totalorder %s179, 0
      %s182 = sadd.s32 %s181, 1
      %s183 = scalar_select %p180, %s181, %s182
      %p186 = pneg %p180
      %p187 = scmp.eq.s32.totalorder %s24, 3
      %p188 = por %p186, %p187
      %p189 = scmp.ne.s32.totalorder %s181, %s184
      %p190 = scmp.eq.s32.totalorder %s24, 0
      %p191 = por %p189, %p190
      %p192 = scmp.ne.s32.totalorder %s181, %s184
      %p193 = scmp.eq.s32.totalorder %s29, 3
      %p194 = por %p192, %p193
      %p195 = scmp.ne.s32.totalorder %s184, %s185
      %p196 = scmp.eq.s32.totalorder %s29, 0
      %p197 = por %p195, %p196
      %p198 = scmp.ne.s32.totalorder %s184, %s185
      %p199 = scmp.eq.s32.totalorder %s30, 3
      %p200 = por %p198, %p199
      %p202 = scmp.ne.s32.totalorder %s185, %s201
      %p203 = scmp.eq.s32.totalorder %s30, 0
      %p204 = por %p202, %p203
      %p205 = scmp.le.s32.totalorder 1, %s24
      %p206 = scmp.lt.s32.totalorder %s24, 5
      %p207 = pnand %p205, %p206
      %p208 = pneg %p207
      // Predicated region
      $region9: #{tpu_custom_call.1} parent=5 // pred_check
        _
      $region10: #{tpu_custom_call.1} parent=5 // pred_check_branch
        %210 = sbr.rel (%p207) target = $region12
      $region11: #{tpu_custom_call.1} parent=5 // pred_region
        %s211 = ssub.s32 %s24, 1
        // Predicated region
        $region13: #{tpu_custom_call.1} parent=11 // pred_check
          %p212 = pneg %p141
        $region14: #{tpu_custom_call.1} parent=11 // pred_check_branch
          %214 = sbr.rel (%p212) target = $region16
        $region15: #{tpu_custom_call.1} parent=11 // pred_region
          _
        $region16: #{tpu_custom_call.1} parent=11 // pred_fallthru
          _
      $region12: #{tpu_custom_call.1} parent=5 // pred_fallthru
        _
      %p215 = scmp.lt.s32.totalorder %s24, 4
      // Predicated region
      $region17: #{tpu_custom_call.1} parent=5 // pred_check
        %p216 = pneg %p215
      $region18: #{tpu_custom_call.1} parent=5 // pred_check_branch
        %218 = sbr.rel (%p216) target = $region20
      $region19: #{tpu_custom_call.1} parent=5 // pred_region
        // Predicated region
        $region21: #{tpu_custom_call.1} parent=19 // pred_check
          %p219 = pneg %p58
        $region22: #{tpu_custom_call.1} parent=19 // pred_check_branch
          %221 = sbr.rel (%p219) target = $region24
        $region23: #{tpu_custom_call.1} parent=19 // pred_region
          %s222 = sand.u32 %s48, 1
          %s223 = scalar_lea.sflag [#allocation3], %s222
          %s224 = sand.u32 %s48, 1
          %s225 = smul.addr %s224, 64
          %s226 = scalar_lea.vmem [#allocation2], %s225
          %s228 = ssub.s32 1024, 1024
          %229 = vsyncadd %s223, %s228
          %s230 = smul.addr %s32, 8
          %s231 = smul.addr %s31, 16
          %s232 = sadd.s32 %s230, %s231
          %s233 = smul.addr %s232, 128
          %s234 = scalar_lea.hbm %s0, %s233
          %s235 = sshll.u32 %s226, 4
          %s236 = int_to_ptr.vmem [resolvable:$true] %s235
          %241 = dma.hbm_to_vmem [thread:$0]  %s234, 1024, %s236, %s223, 128, 128, 8
        $region24: #{tpu_custom_call.1} parent=19 // pred_fallthru
          _
        // Predicated region
        $region25: #{tpu_custom_call.1} parent=19 // pred_check
          %p242 = pneg %p86
        $region26: #{tpu_custom_call.1} parent=19 // pred_check_branch
          %244 = sbr.rel (%p242) target = $region28
        $region27: #{tpu_custom_call.1} parent=19 // pred_region
          %s245 = sand.u32 %s24, 1
          %s246 = scalar_lea.sflag [#allocation6], %s245
          %s247 = sand.u32 %s76, 1
          %s248 = smul.addr %s247, 16
          %s249 = scalar_lea.vmem [#allocation5], %s248
          %s251 = ssub.s32 256, 256
          %252 = vsyncadd %s246, %s251
          %s253 = smul.addr %s32, 2
          %s254 = smul.addr %s31, 4
          %s255 = sadd.s32 %s253, %s254
          %s256 = smul.addr %s255, 128
          %s257 = scalar_lea.hbm %s1, %s256
          %s258 = sshll.u32 %s249, 4
          %s259 = int_to_ptr.vmem [resolvable:$true] %s258
          %264 = dma.hbm_to_vmem [thread:$0]  %s257, 256, %s259, %s246, 128, 128, 8
        $region28: #{tpu_custom_call.1} parent=19 // pred_fallthru
          _
        // Predicated region
        $region29: #{tpu_custom_call.1} parent=19 // pred_check
          %p265 = pneg %p114
        $region30: #{tpu_custom_call.1} parent=19 // pred_check_branch
          %267 = sbr.rel (%p265) target = $region32
        $region31: #{tpu_custom_call.1} parent=19 // pred_region
          %s268 = sand.u32 %s24, 1
          %s269 = scalar_lea.sflag [#allocation6], %s268
          %s270 = sand.u32 %s104, 1
          %s271 = smul.addr %s270, 16
          %s272 = scalar_lea.vmem [#allocation7], %s271
          %s274 = ssub.s32 256, 256
          %275 = vsyncadd %s269, %s274
          %s276 = smul.addr %s32, 2
          %s277 = smul.addr %s31, 4
          %s278 = sadd.s32 %s276, %s277
          %s279 = smul.addr %s278, 128
          %s280 = scalar_lea.hbm %s2, %s279
          %s281 = sshll.u32 %s272, 4
          %s282 = int_to_ptr.vmem [resolvable:$true] %s281
          %287 = dma.hbm_to_vmem [thread:$0]  %s280, 256, %s282, %s269, 128, 128, 8
        $region32: #{tpu_custom_call.1} parent=19 // pred_fallthru
          _
      $region20: #{tpu_custom_call.1} parent=5 // pred_fallthru
        _
      %p288 = scmp.le.s32.totalorder 1, %s24
      %p289 = scmp.lt.s32.totalorder %s24, 5
      %p290 = pnand %p288, %p289
      %p291 = pneg %p290
      // Predicated region
      $region33: #{tpu_custom_call.1} parent=5 // pred_check
        _
      $region34: #{tpu_custom_call.1} parent=5 // pred_check_branch
        %293 = sbr.rel (%p290) target = $region36
      $region35: #{tpu_custom_call.1} parent=5 // pred_region
        %s294 = ssub.s32 %s24, 1
        %s295 = sand.u32 %s51, 1
        %s296 = scalar_lea.sflag [#allocation3], %s295
        %s297 = sand.u32 %s51, 1
        %s298 = smul.addr %s297, 64
        %s299 = scalar_lea.vmem [#allocation2], %s298
        // Predicated region
        $region37: #{tpu_custom_call.1} parent=35 // pred_check
          %p300 = pneg %p64
        $region38: #{tpu_custom_call.1} parent=35 // pred_check_branch
          %302 = sbr.rel (%p300) target = $region40
        $region39: #{tpu_custom_call.1} parent=35 // pred_region
          %303 = dma.done %s296, 1024
        $region40: #{tpu_custom_call.1} parent=35 // pred_fallthru
          _
        %s304 = sand.u32 %s29, 1
        %s305 = scalar_lea.sflag [#allocation6], %s304
        %s306 = sand.u32 %s79, 1
        %s307 = smul.addr %s306, 16
        %s308 = scalar_lea.vmem [#allocation5], %s307
        // Predicated region
        $region41: #{tpu_custom_call.1} parent=35 // pred_check
          %p309 = pneg %p92
        $region42: #{tpu_custom_call.1} parent=35 // pred_check_branch
          %311 = sbr.rel (%p309) target = $region44
        $region43: #{tpu_custom_call.1} parent=35 // pred_region
          %312 = dma.done %s305, 256
        $region44: #{tpu_custom_call.1} parent=35 // pred_fallthru
          _
        %s313 = sand.u32 %s29, 1
        %s314 = scalar_lea.sflag [#allocation6], %s313
        %s315 = sand.u32 %s107, 1
        %s316 = smul.addr %s315, 16
        %s317 = scalar_lea.vmem [#allocation7], %s316
        // Predicated region
        $region45: #{tpu_custom_call.1} parent=35 // pred_check
          %p318 = pneg %p120
        $region46: #{tpu_custom_call.1} parent=35 // pred_check_branch
          %320 = sbr.rel (%p318) target = $region48
        $region47: #{tpu_custom_call.1} parent=35 // pred_region
          %321 = dma.done %s314, 256
        $region48: #{tpu_custom_call.1} parent=35 // pred_fallthru
          _
        %s322 = sand.u32 %s51, 1
        %s323 = scalar_lea.sflag [#allocation3], %s322
        %s324 = sand.u32 %s51, 1
        %s325 = smul.addr %s324, 64
        %s326 = scalar_lea.vmem [#allocation2], %s325
        %p327 = pneg %p64
        %p328 = pneg %p61
        %s329 = sand.u32 %s29, 1
        %s330 = scalar_lea.sflag [#allocation6], %s329
        %s331 = sand.u32 %s79, 1
        %s332 = smul.addr %s331, 16
        %s333 = scalar_lea.vmem [#allocation5], %s332
        %p334 = pneg %p92
        %p335 = pneg %p89
        %s336 = sand.u32 %s29, 1
        %s337 = scalar_lea.sflag [#allocation6], %s336
        %s338 = sand.u32 %s107, 1
        %s339 = smul.addr %s338, 16
        %s340 = scalar_lea.vmem [#allocation7], %s339
        %p341 = pneg %p120
        %p342 = pneg %p117
        %p343 = pneg %p141
        %p344 = pneg %p138
        %p345 = pneg %p169
        %p346 = pneg %p166
        %s347 = sand.u32 %s156, 1
        %s348 = scalar_lea.sflag [#allocation4], %s347
        %s349 = sand.u32 %s156, 1
        %s350 = smul.addr %s349, 16
        %s351 = scalar_lea.vmem [#allocation8], %s350
        %p352 = pneg %p197
        %p353 = pneg %p194
        %s354 = sand.u32 %s184, 1
        %s355 = scalar_lea.sflag [#allocation10], %s354
        %s356 = sand.u32 %s184, 1
        %s357 = smul.addr %s356, 2
        %s358 = scalar_lea.vmem [#allocation9], %s357
        %v360 = vld [vmem:[%s308] sm:$0xff]
        %v361 = vld [vmem:[%s308 + $0x8] sm:$0xff]
        %v362 = vmax.f32 %v360, %v361
        %364 = vrot.lane.b32.xlu0 %v362, 124
        %v365 = vpop.permute.xlu0 %364
        %v367 = vmax.f32 %v362, %v365
        %v368 = vld [vmem:[%s299] sm:$0xff]
        %v369 = vld [vmem:[%s299 + $0x8] sm:$0xff]
        %v370 = vld [vmem:[%s299 + $0x10] sm:$0xff]
        %v371 = vld [vmem:[%s299 + $0x18] sm:$0xff]
        %v372 = vld [vmem:[%s299 + $0x20] sm:$0xff]
        %v373 = vld [vmem:[%s299 + $0x28] sm:$0xff]
        %v374 = vld [vmem:[%s299 + $0x30] sm:$0xff]
        %v375 = vld [vmem:[%s299 + $0x38] sm:$0xff]
        %v376 = vmax.f32 %v368, %v369
        %v377 = vmax.f32 %v370, %v371
        %v378 = vmax.f32 %v372, %v373
        %v379 = vmax.f32 %v374, %v375
        %384 = vrot.lane.b32.xlu0 %v376, 124
        %v385 = vpop.permute.xlu0 %384
        %386 = vrot.lane.b32.xlu0 %v377, 124
        %v387 = vpop.permute.xlu0 %386
        %388 = vrot.lane.b32.xlu0 %v378, 124
        %v389 = vpop.permute.xlu0 %388
        %390 = vrot.lane.b32.xlu0 %v379, 124
        %v391 = vpop.permute.xlu0 %390
        %v396 = vmax.f32 %v376, %v385
        %v397 = vmax.f32 %v377, %v387
        %v398 = vmax.f32 %v378, %v389
        %v399 = vmax.f32 %v379, %v391
        %v400 = vld [vmem:[%s317] sm:$0xff]
        %v401 = vld [vmem:[%s317 + $0x8] sm:$0xff]
        %v402 = vmax.f32 %v400, %v401
        %404 = vrot.lane.b32.xlu0 %v402, 124
        %v405 = vpop.permute.xlu0 %404
        %v407 = vmax.f32 %v402, %v405
        %v408 = vlaneseq
        %v409 = vshrl.u32 %v408, 7
        %v410 = vrot.slane %v367, 7
        %v411 = vrot.slane %v396, 7
        %v412 = vrot.slane %v397, 7
        %v413 = vrot.slane %v398, 7
        %v414 = vrot.slane %v399, 7
        %v415 = vrot.slane %v407, 7
        %vm416 = vcmp.eq.s32.totalorder %v409, 0
        %v417 = vsel %vm416, 1, 0
        %vm418 = vcmp.eq.s32.totalorder %v417, 1
        %v419 = vsel %vm418, 0.0, %v410
        %v420 = vsel %vm418, 0.0, %v411
        %v421 = vsel %vm418, 0.0, %v412
        %v422 = vsel %vm418, 0.0, %v413
        %v423 = vsel %vm418, 0.0, %v414
        %v424 = vsel %vm418, 0.0, %v415
        %v425 = vpack.c.bf16 %v419, %v419
        %v426 = vpack.c.bf16 %v420, %v420
        %v427 = vpack.c.bf16 %v421, %v421
        %v428 = vpack.c.bf16 %v422, %v422
        %v429 = vpack.c.bf16 %v423, %v423
        %v430 = vpack.c.bf16 %v424, %v424
        %v431 = vpack.c.bf16 %v367, %v367
        %v432 = vpack.c.bf16 %v396, %v396
        %v433 = vpack.c.bf16 %v397, %v397
        %v434 = vpack.c.bf16 %v398, %v398
        %v435 = vpack.c.bf16 %v399, %v399
        %v436 = vpack.c.bf16 %v407, %v407
        %v437 = vrot.slane %v367, 1
        %v438 = vrot.slane %v396, 1
        %v439 = vrot.slane %v397, 1
        %v440 = vrot.slane %v398, 1
        %v441 = vrot.slane %v399, 1
        %v442 = vrot.slane %v407, 1
        %vm443 = vcmp.eq.s32.totalorder %v409, 7
        %v444 = vsel %vm443, 1, 0
        %vm445 = vcmp.eq.s32.totalorder %v444, 1
        %v446 = vsel %vm445, 0.0, %v437
        %v447 = vsel %vm445, 0.0, %v438
        %v448 = vsel %vm445, 0.0, %v439
        %v449 = vsel %vm445, 0.0, %v440
        %v450 = vsel %vm445, 0.0, %v441
        %v451 = vsel %vm445, 0.0, %v442
        %v452 = vpack.c.bf16 %v446, %v446
        %v453 = vpack.c.bf16 %v447, %v447
        %v454 = vpack.c.bf16 %v448, %v448
        %v455 = vpack.c.bf16 %v449, %v449
        %v456 = vpack.c.bf16 %v450, %v450
        %v457 = vpack.c.bf16 %v451, %v451
        %462 = vrot.lane.b32.xlu0 %v431, 4
        %v463 = vpop.permute.xlu0 %462
        %464 = vrot.lane.b32.xlu0 %v432, 4
        %v465 = vpop.permute.xlu0 %464
        %466 = vrot.lane.b32.xlu0 %v433, 4
        %v467 = vpop.permute.xlu0 %466
        %468 = vrot.lane.b32.xlu0 %v434, 4
        %v469 = vpop.permute.xlu0 %468
        %474 = vrot.lane.b32.xlu0 %v452, 8
        %v475 = vpop.permute.xlu0 %474
        %476 = vrot.lane.b32.xlu0 %v453, 8
        %v477 = vpop.permute.xlu0 %476
        %478 = vrot.lane.b32.xlu0 %v454, 8
        %v479 = vpop.permute.xlu0 %478
        %480 = vrot.lane.b32.xlu0 %v455, 8
        %v481 = vpop.permute.xlu0 %480
        %vm482 = vcmask 31744
        %v485 = vsel %vm482, %v425, %v463
        %v488 = vsel %vm482, %v426, %v465
        %v491 = vsel %vm482, %v427, %v467
        %v494 = vsel %vm482, %v428, %v469
        %vm495 = vcmask 64512
        %v497 = vsel %vm495, %v485, %v475
        %v499 = vsel %vm495, %v488, %v477
        %v501 = vsel %vm495, %v491, %v479
        %v503 = vsel %vm495, %v494, %v481
        %505 = vrot.lane.b32.xlu0 %v435, 4
        %v506 = vpop.permute.xlu0 %505
        %508 = vrot.lane.b32.xlu0 %v456, 8
        %v509 = vpop.permute.xlu0 %508
        %v512 = vsel %vm482, %v429, %v506
        %v514 = vsel %vm495, %v512, %v509
        %516 = vrot.lane.b32.xlu0 %v436, 4
        %v517 = vpop.permute.xlu0 %516
        %519 = vrot.lane.b32.xlu0 %v457, 8
        %v520 = vpop.permute.xlu0 %519
        %v523 = vsel %vm482, %v430, %v517
        %v525 = vsel %vm495, %v523, %v520
        %530 = vrot.lane.b32.xlu0 %v499, 12
        %v531 = vpop.permute.xlu0 %530
        %532 = vrot.lane.b32.xlu0 %v501, 12
        %v533 = vpop.permute.xlu0 %532
        %534 = vrot.lane.b32.xlu0 %v503, 12
        %v535 = vpop.permute.xlu0 %534
        %536 = vrot.lane.b32.xlu0 %v514, 12
        %v537 = vpop.permute.xlu0 %536
        %539 = vrot.lane.b32.xlu0 %v501, 24
        %v540 = vpop.permute.xlu0 %539
        %541 = vrot.lane.b32.xlu0 %v503, 24
        %v542 = vpop.permute.xlu0 %541
        %543 = vrot.lane.b32.xlu0 %v514, 24
        %v544 = vpop.permute.xlu0 %543
        %545 = vrot.lane.b32.xlu0 %v525, 24
        %v546 = vpop.permute.xlu0 %545
        %vm547 = vcmask 97280
        %v549 = vsel %vm547, %v497, %v531
        %v551 = vsel %vm547, %v499, %v533
        %v553 = vsel %vm547, %v501, %v535
        %v555 = vsel %vm547, %v503, %v537
        %vm556 = vcmask 195584
        %v558 = vsel %vm556, %v549, %v540
        %v560 = vsel %vm556, %v551, %v542
        %v562 = vsel %vm556, %v553, %v544
        %v564 = vsel %vm556, %v555, %v546
        %v565 = vld [vmem:[%s3] sm:$0xf]
        %v566 = vld [vmem:[%s3 + $0x4] sm:$0xf]
        %v567 = vld [vmem:[%s3 + $0x8] sm:$0xf]
        %v568 = vld [vmem:[%s3 + $0xc] sm:$0xf]
        %v569 = vld [vmem:[%s3 + $0x10] sm:$0x3]
        %v574 = vunpack.c.l.b16 %v558
        %v575 = vunpack.c.l.b16 %v560
        %v576 = vunpack.c.l.b16 %v562
        %v577 = vunpack.c.l.b16 %v564
        %v578 = vpack.c.b16 %v575, %v574
        %v579 = vpack.c.b16 %v577, %v576
        %v585 = vunpack.c.l.b16 %v565
        %v586 = vunpack.c.l.b16 %v566
        %v587 = vunpack.c.l.b16 %v567
        %v588 = vunpack.c.l.b16 %v568
        %v589 = vunpack.c.l.b16 %v569
        %v590 = vpack.c.b16 %v586, %v585
        %v591 = vpack.c.b16 %v588, %v587
        %v592 = vpack.c.b16 %v589, %v589
        %vm595 = vcmask 293888
        %v597 = vsel %vm595, %v578, 0
        %v600 = vsel %vm595, %v579, 0
        %vm602 = vcmask 1041408
        %v604 = vsel %vm602, %v592, 0
        %606 = vmatprep.subr.bf16.mxu0 0
        %607 = vmatpush1.bf16.msra.mxu0 %v590
        %608 = vmatprep.subr.bf16.mxu0 0
        %609 = vmatpush1.bf16.msra.mxu0 %v591
        %610 = vmatprep.subr.bf16.mxu0 0
        %611 = vmatpush1.bf16.msra.mxu0 %v604
        %612 = vmatprep.subr.bf16.mxu0 0
        %613 = vmatpush1.bf16.msra.mxu0 0
        %614 = vmatprep.subr.bf16.mxu0 0
        %615 = vmatpush1.bf16.msra.mxu0 0
        %616 = vmatprep.subr.bf16.mxu0 0
        %617 = vmatpush1.bf16.msra.mxu0 0
        %618 = vmatprep.subr.bf16.mxu0 0
        %619 = vmatpush1.bf16.msra.mxu0 0
        %620 = vmatprep.subr.bf16.mxu0 0
        %621 = vmatpush1.bf16.msra.mxu0 0
        %622 = vmatprep.subr.bf16.mxu0 0
        %623 = vmatpush1.bf16.msra.mxu0 0
        %624 = vmatprep.subr.bf16.mxu0 0
        %625 = vmatpush1.bf16.msra.mxu0 0
        %626 = vmatprep.subr.bf16.mxu0 0
        %627 = vmatpush1.bf16.msra.mxu0 0
        %628 = vmatprep.subr.bf16.mxu0 0
        %629 = vmatpush1.bf16.msra.mxu0 0
        %630 = vmatprep.subr.bf16.mxu0 0
        %631 = vmatpush1.bf16.msra.mxu0 0
        %632 = vmatprep.subr.bf16.mxu0 0
        %633 = vmatpush1.bf16.msra.mxu0 0
        %634 = vmatprep.subr.bf16.mxu0 0
        %635 = vmatpush1.bf16.msra.mxu0 0
        %636 = vmatprep.subr.bf16.mxu0 0
        %637 = vmatpush1.bf16.msra.mxu0 0
        %638 = vmatprep.mubr.bf16.mxu0 0
        %639 = vmatmul.mubr.bf16.gmra.mrb[0].mxu0 %v597
        %v640 = vpop.f32.mrb[0].mxu0
        %v641 = vadd.f32 0.0, %v640
        %v642 = vpop.f32.mrb[0].mxu0
        %v643 = vpop.f32.mrb[0].mxu0
        %v644 = vadd.f32 0.0, %v643
        %v645 = vpop.f32.mrb[0].mxu0
        %646 = vmatprep.mubr.bf16.mxu0 0
        %647 = vmatmul.mubr.bf16.gmra.mrb[0].mxu0 %v600
        %v648 = vpop.f32.mrb[0].mxu0
        %v649 = vadd.f32 0.0, %v648
        %v650 = vpop.f32.mrb[0].mxu0
        %v651 = vpop.f32.mrb[0].mxu0
        %v652 = vadd.f32 0.0, %v651
        %v653 = vpop.f32.mrb[0].mxu0
        %654 = vdwg.mxu0
        %v655 = vpack.c.bf16 %v641, %v641
        %v656 = vpack.c.bf16 %v644, %v644
        %v657 = vpack.c.bf16 %v649, %v649
        %v658 = vpack.c.bf16 %v652, %v652
        %vm659 = vcmask 60416
        %660 = vst.msk [vmem:[%s351] sm:$0xf] %vm659, %v655
        %661 = vst.msk [vmem:[%s351 + $0x4] sm:$0xf] %vm659, %v656
        %662 = vst.msk [vmem:[%s351 + $0x8] sm:$0xf] %vm659, %v657
        %663 = vst.msk [vmem:[%s351 + $0xc] sm:$0xf] %vm659, %v658
        %v664 = vsel %vm495, %v641, 0.0
        %v665 = vsel %vm495, %v644, 0.0
        %v666 = vadd.f32 %v664, %v665
        %v667 = vsel %vm495, %v649, 0.0
        %v668 = vadd.f32 %v666, %v667
        %v669 = vsel %vm495, %v652, 0.0
        %v670 = vadd.f32 %v668, %v669
        %v671 = vrot.slane %v670, 4
        %v672 = vadd.f32 %v670, %v671
        %v673 = vrot.slane %v672, 2
        %v674 = vadd.f32 %v672, %v673
        %v675 = vrot.slane %v674, 1
        %v676 = vadd.f32 %v674, %v675
        %v677 = vmul.f32 %v641, %v641
        %v678 = vmul.f32 %v644, %v644
        %v679 = vmul.f32 %v649, %v649
        %v680 = vmul.f32 %v652, %v652
        %v681 = vsel %vm495, %v677, 0.0
        %v682 = vsel %vm495, %v678, 0.0
        %v683 = vadd.f32 %v681, %v682
        %v684 = vsel %vm495, %v679, 0.0
        %v685 = vadd.f32 %v683, %v684
        %v686 = vsel %vm495, %v680, 0.0
        %v687 = vadd.f32 %v685, %v686
        %v688 = vrot.slane %v687, 4
        %v689 = vadd.f32 %v687, %v688
        %v690 = vrot.slane %v689, 2
        %v691 = vadd.f32 %v689, %v690
        %v692 = vrot.slane %v691, 1
        %v693 = vadd.f32 %v691, %v692
        %vm694 = vcmask 1040384
        %v695 = vsel %vm694, %v676, %v693
        %vm696 = vcmask 58368
        %697 = vst.msk [vmem:[%s358] sm:$0x3] %vm696, %v695
        %s698 = sand.u32 %s156, 1
        %s699 = scalar_lea.sflag [#allocation4], %s698
        %s700 = sand.u32 %s156, 1
        %s701 = smul.addr %s700, 16
        %s702 = scalar_lea.vmem [#allocation8], %s701
        %s703 = sand.u32 %s184, 1
        %s704 = scalar_lea.sflag [#allocation10], %s703
        %s705 = sand.u32 %s184, 1
        %s706 = smul.addr %s705, 2
        %s707 = scalar_lea.vmem [#allocation9], %s706
        // Predicated region
        $region49: #{tpu_custom_call.1} parent=35 // pred_check
          %p708 = pneg %p166
        $region50: #{tpu_custom_call.1} parent=35 // pred_check_branch
          %710 = sbr.rel (%p708) target = $region52
        $region51: #{tpu_custom_call.1} parent=35 // pred_region
          %s712 = ssub.s32 256, 256
          %713 = vsyncadd %s699, %s712
          %s714 = smul.addr %s34, 4
          %s715 = smul.addr %s33, 8
          %s716 = sadd.s32 %s714, %s715
          %s717 = smul.addr %s716, 64
          %s718 = scalar_lea.hbm %s4, %s717
          %s719 = sshll.u32 %s702, 4
          %s720 = int_to_ptr.vmem [resolvable:$true] %s719
          %725 = dma.vmem_to_hbm [thread:$0]  %s720, 256, %s718, %s699, 64, 64, 4
        $region52: #{tpu_custom_call.1} parent=35 // pred_fallthru
          _
        // Predicated region
        $region53: #{tpu_custom_call.1} parent=35 // pred_check
          %p726 = pneg %p194
        $region54: #{tpu_custom_call.1} parent=35 // pred_check_branch
          %728 = sbr.rel (%p726) target = $region56
        $region55: #{tpu_custom_call.1} parent=35 // pred_region
          %s730 = ssub.s32 32, 32
          %731 = vsyncadd %s704, %s730
          %s732 = smul.addr %s33, 2
          %s733 = sadd.s32 %s34, %s732
          %s734 = smul.addr %s733, 32
          %s735 = scalar_lea.hbm %s5, %s734
          %s737 = sshll.u32 %s707, 4
          %s738 = int_to_ptr.vmem [resolvable:$true] %s737
          %740 = dma.vmem_to_hbm [thread:$0]  %s738, 32, %s735, %s704
        $region56: #{tpu_custom_call.1} parent=35 // pred_fallthru
          _
      $region36: #{tpu_custom_call.1} parent=5 // pred_fallthru
        _
      %p741 = scmp.le.s32.totalorder 2, %s24
      // Predicated region
      $region57: #{tpu_custom_call.1} parent=5 // pred_check
        %p742 = pneg %p741
      $region58: #{tpu_custom_call.1} parent=5 // pred_check_branch
        %744 = sbr.rel (%p742) target = $region60
      $region59: #{tpu_custom_call.1} parent=5 // pred_region
        %s745 = ssub.s32 %s24, 2
        // Predicated region
        $region61: #{tpu_custom_call.1} parent=59 // pred_check
          %p746 = pneg %p172
        $region62: #{tpu_custom_call.1} parent=59 // pred_check_branch
          %748 = sbr.rel (%p746) target = $region64
        $region63: #{tpu_custom_call.1} parent=59 // pred_region
          %s749 = sand.u32 %s157, 1
          %s750 = scalar_lea.sflag [#allocation4], %s749
          %s751 = sand.u32 %s157, 1
          %s752 = smul.addr %s751, 16
          %s753 = scalar_lea.vmem [#allocation8], %s752
          %754 = dma.done %s750, 256
        $region64: #{tpu_custom_call.1} parent=59 // pred_fallthru
          _
        // Predicated region
        $region65: #{tpu_custom_call.1} parent=59 // pred_check
          %p755 = pneg %p200
        $region66: #{tpu_custom_call.1} parent=59 // pred_check_branch
          %757 = sbr.rel (%p755) target = $region68
        $region67: #{tpu_custom_call.1} parent=59 // pred_region
          %s758 = sand.u32 %s185, 1
          %s759 = scalar_lea.sflag [#allocation10], %s758
          %s760 = sand.u32 %s185, 1
          %s761 = smul.addr %s760, 2
          %s762 = scalar_lea.vmem [#allocation9], %s761
          %763 = dma.done %s759, 32
        $region68: #{tpu_custom_call.1} parent=59 // pred_fallthru
          _
      $region60: #{tpu_custom_call.1} parent=5 // pred_fallthru
        _
    $region6: #{tpu_custom_call.1} parent=1 // loop_footer
      %s28 = sadd.s32 1, %s24
    $region7: #{tpu_custom_call.1} parent=1 // loop_footer_branch
      %23 = sbr.rel target = $region3
    $region8: #{tpu_custom_call.1} parent=1 // loop_exit
      _
    %764 = vsyncpa [#allocation3], 1
    %s765 = scalar_lea.sflag [#allocation3], 1
    %766 = vsyncpa %s765, 1
    %767 = vsyncpa [#allocation6], 1
    %s768 = scalar_lea.sflag [#allocation6], 1
    %769 = vsyncpa %s768, 1
    %770 = vsyncpa [#allocation4], 1
    %s771 = scalar_lea.sflag [#allocation4], 1
    %772 = vsyncpa %s771, 1
    %773 = vsyncpa [#allocation10], 1
    %s774 = scalar_lea.sflag [#allocation10], 1
    %775 = vsyncpa %s774, 1

</llo_original>
